<compile_context>
chip_gen: v5e
topology: v5e:2x2
jax: 0.10.0
libtpu: 0.0.40
codegen_flags: <defaults>
</compile_context>

<pallas_src>
import numpy as np
import jax
import jax.numpy as jnp
from jax.experimental import pallas as pl
from jax.experimental.pallas import tpu as pltpu


# ------------------------------ kernel ------------------------------------- #

def _q_mlp_kernel(x_ref, w1_ref, b1_ref, w2_ref, b2_ref, w3_ref, out_ref):
    """Fused 3-layer MLP for one batch tile, batch on the lane axis.

    x_ref : (D_in, TILE_B) bf16     w1_ref: (H1p, D_in) bf16    b1_ref: (H1p, 1) f32
                                    w2_ref: (H2p, H1p)  bf16    b2_ref: (H2p, 1) f32
                                    w3_ref: (1, H2p)    bf16
    out_ref: (1, TILE_B) f32   (lane-dense, unmasked store)
    """
    # Layer 1: one K = obs_dim+act_dim matmul (obs/act already stacked on sublanes).
    h1 = jnp.dot(w1_ref[...], x_ref[...], preferred_element_type=jnp.float32)
    h1 = jnp.maximum(h1 + b1_ref[...], 0.0)            # bias + ReLU in f32 (VPU)

    # Layer 2.
    h2 = jnp.dot(w2_ref[...], h1.astype(jnp.bfloat16),
                 preferred_element_type=jnp.float32)
    h2 = jnp.maximum(h2 + b2_ref[...], 0.0)

    # Layer 3 (output width 1): (1, H2p) @ (H2p, TILE_B) -> (1, TILE_B).  Batch
    # stays on the lane axis, so no transpose is needed; b3 is folded in the wrapper.
    q = jnp.dot(w3_ref[...], h2.astype(jnp.bfloat16),
                preferred_element_type=jnp.float32)
    out_ref[...] = q.astype(out_ref.dtype)


# ------------------------------ wrapper ------------------------------------ #

def _round_up(x, m):
    return (x + m - 1) // m * m


def _choose_tile(batch, max_tile_b):
    """Batch-tile size along the lane axis.

    <= 1024: a single full tile (block == full array dim, always (8,128)-legal).
    >  1024: 128-multiple tiles capped at max_tile_b, with num_tiles >= 2 so the
             "parallel" batch axis can shard across v7x's two TensorCores.
    """
    if batch <= 1024:
        return batch, 1
    cap = max(128, _round_up(max_tile_b, 128))         # keep lane-dense legality
    tile_b = min(cap, _round_up(-(-batch // 2), 128))  # ceil(B/2) rounded to 128
    num_tiles = -(-batch // tile_b)
    return tile_b, num_tiles


def mlp_q_function(obs, act, packed_params, *, max_tile_b=4096):
    """Forward pass of MLPQFunction. Returns q of shape (B,) (last dim squeezed)."""
    B = obs.shape[0]
    w1_t, b1_c, w2_t, b2_c, w3_r, b3 = packed_params
    H1p, D_in = w1_t.shape
    H2p = w2_t.shape[0]

    # Batch-on-lanes input: obs/act stacked along sublanes -> (D_in, B) bf16.
    # (A producer emitting this layout directly would skip the transpose + cast.)
    x_t = jnp.concatenate([obs.T, act.T], axis=0).astype(jnp.bfloat16)

    tile_b, num_tiles = _choose_tile(B, max_tile_b)
    padded_b = num_tiles * tile_b
    if padded_b != B:
        # Zero-fill the ragged last tile so padded lanes are well-defined, never NaN.
        x_t = jnp.pad(x_t, ((0, 0), (0, padded_b - B)))

    const = lambda r, c: pl.BlockSpec((r, c), lambda i: (0, 0))   # VMEM-resident

    flops = 2 * B * (D_in * H1p + H1p * H2p + H2p)
    bytes_accessed = (x_t.size * 2 + padded_b * 4                  # input + output
                      + (w1_t.size + w2_t.size + w3_r.size) * 2    # bf16 weights
                      + (b1_c.size + b2_c.size) * 4)               # f32 biases

    out = pl.pallas_call(
        _q_mlp_kernel,
        out_shape=jax.ShapeDtypeStruct((1, padded_b), jnp.float32),
        grid_spec=pltpu.PrefetchScalarGridSpec(
            num_scalar_prefetch=0,
            grid=(num_tiles,),
            in_specs=[
                pl.BlockSpec((D_in, tile_b), lambda i: (0, i)),    # x_T batch tile
                const(H1p, D_in),                                  # W1_T
                const(H1p, 1),                                     # b1 (column)
                const(H2p, H1p),                                   # W2_T
                const(H2p, 1),                                     # b2 (column)
                const(1, H2p),                                     # w3 (row)
            ],
            out_specs=pl.BlockSpec((1, tile_b), lambda i: (0, i)),
        ),
        compiler_params=pltpu.CompilerParams(
            # Batch tiles are independent; default 32 MiB scoped VMEM is ample
            # (< ~3 MiB live per tile even at tile_b = 4096).
            dimension_semantics=("parallel",),
        ),
        cost_estimate=pl.CostEstimate(flops=flops, transcendentals=0,
                                      bytes_accessed=bytes_accessed),
    )(x_t, w1_t, b1_c, w2_t, b2_c, w3_r)

    # torch.squeeze(q, -1); +b3 folded here (drops a padded (1,1) VMEM stream).
    return out[0, :B] + b3


# --------------------------- parameter helpers ------------------------------ #

def init_params(key, obs_dim, act_dim, hidden_sizes):
    """PyTorch nn.Linear-style init: U(-1/sqrt(fan_in), 1/sqrt(fan_in)).

    Returns the *unpadded, untransposed* per-layer (W, b) list (f32 reference)."""
    sizes = [obs_dim + act_dim] + list(hidden_sizes) + [1]
    raw = []
    for i in range(len(sizes) - 1):
        fan_in, fan_out = sizes[i], sizes[i + 1]
        key, kw, kb = jax.random.split(key, 3)
        bound = 1.0 / float(np.sqrt(fan_in))
        w = jax.random.uniform(kw, (fan_in, fan_out), jnp.float32, -bound, bound)
        b = jax.random.uniform(kb, (fan_out,), jnp.float32, -bound, bound)
        raw.append((w, b))
    return raw


def pack_params(raw, lane=128):
    """Repack raw (W, b) layers into the kernel layout: pre-transposed weights,
    hidden dims zero-padded to 128 (exact under ReLU + matmul), weights cast to
    bf16; biases kept f32 as (H, 1) columns; b3 as an f32 scalar (wrapper adds it)."""
    (w1, b1), (w2, b2), (w3, b3) = raw
    d_in, h1 = w1.shape
    h2 = w2.shape[1]
    h1p, h2p = _round_up(h1, lane), _round_up(h2, lane)

    w1_t = jnp.zeros((h1p, d_in), jnp.float32).at[:h1, :].set(w1.T).astype(jnp.bfloat16)
    b1_c = jnp.zeros((h1p, 1), jnp.float32).at[:h1, 0].set(b1)
    w2_t = jnp.zeros((h2p, h1p), jnp.float32).at[:h2, :h1].set(w2.T).astype(jnp.bfloat16)
    b2_c = jnp.zeros((h2p, 1), jnp.float32).at[:h2, 0].set(b2)
    w3_r = jnp.zeros((1, h2p), jnp.float32).at[0, :h2].set(w3[:, 0]).astype(jnp.bfloat16)
    b3_s = b3.reshape(()).astype(jnp.float32)
    return (w1_t, b1_c, w2_t, b2_c, w3_r, b3_s)


# ------------------------------ references ---------------------------------- #

def _reference_f32(obs, act, raw):
    """Pure-f32 reference matching the PyTorch module exactly."""
    (w1, b1), (w2, b2), (w3, b3) = raw
    x = jnp.concatenate([obs, act], axis=-1)
    h = jnp.maximum(x @ w1 + b1, 0.0)
    h = jnp.maximum(h @ w2 + b2, 0.0)
    return jnp.squeeze(h @ w3 + b3, -1)


def _reference_bf16(obs, act, packed):
    """Plain-JAX mirror of the kernel math (bf16 operands, f32 accumulation)."""
    w1_t, b1_c, w2_t, b2_c, w3_r, b3 = packed
    x_t = jnp.concatenate([obs.T, act.T], axis=0).astype(jnp.bfloat16)
    h1 = jnp.maximum(jnp.dot(w1_t, x_t, preferred_element_type=jnp.float32) + b1_c, 0.0)
    h2 = jnp.maximum(jnp.dot(w2_t, h1.astype(jnp.bfloat16),
                             preferred_element_type=jnp.float32) + b2_c, 0.0)
    q = jnp.dot(w3_r, h2.astype(jnp.bfloat16), preferred_element_type=jnp.float32)
    return q[0] + b3


# --------------------------------- demo ------------------------------------- #

if __name__ == "__main__":
    key = jax.random.PRNGKey(0)
    k_obs, k_act, k_param, k_obs2, k_act2 = jax.random.split(key, 5)

    obs_dim, act_dim = 12, 4
    hidden_sizes = (32, 32)

    raw = init_params(k_param, obs_dim, act_dim, hidden_sizes)
    packed = pack_params(raw)

    # --- small batch: single-tile path -------------------------------------- #
    B = 8
    obs = jax.random.normal(k_obs, (B, obs_dim), jnp.float32)
    act = jax.random.normal(k_act, (B, act_dim), jnp.float32)

    q = mlp_q_function(obs, act, packed)
    jax.block_until_ready(q)
    assert q.shape == (B,), q.shape
    # Tight check vs. a plain-JAX mirror of the kernel math (same bf16/f32 scheme).
    assert jnp.allclose(q, _reference_bf16(obs, act, packed), atol=1e-4, rtol=1e-3)
    # Loose check vs. the exact f32 PyTorch-equivalent reference.
    assert jnp.allclose(q, _reference_f32(obs, act, raw), atol=5e-2, rtol=5e-2)

    # --- larger batch: multi-tile path (>=2 tiles, ragged last tile padded) -- #
    B2 = 1300
    obs2 = jax.random.normal(k_obs2, (B2, obs_dim), jnp.float32)
    act2 = jax.random.normal(k_act2, (B2, act_dim), jnp.float32)

    q2 = mlp_q_function(obs2, act2, packed)
    jax.block_until_ready(q2)
    assert q2.shape == (B2,), q2.shape
    assert jnp.allclose(q2, _reference_bf16(obs2, act2, packed), atol=1e-4, rtol=1e-3)
    assert jnp.allclose(q2, _reference_f32(obs2, act2, raw), atol=5e-2, rtol=5e-2)

    print("KERNEL_OK")
</pallas_src>

<mosaic_0001>
module attributes {stable_mosaic.version = 11 : i64} {
  func.func @_q_mlp_kernel(%arg0: i32, %arg1: memref<16x8xbf16, #tpu.memory_space<vmem>>, %arg2: memref<128x16xbf16, #tpu.memory_space<vmem>>, %arg3: memref<128x1xf32, #tpu.memory_space<vmem>>, %arg4: memref<128x128xbf16, #tpu.memory_space<vmem>>, %arg5: memref<128x1xf32, #tpu.memory_space<vmem>>, %arg6: memref<1x128xbf16, #tpu.memory_space<vmem>>, %arg7: memref<1x8xf32, #tpu.memory_space<vmem>>) attributes {dimension_semantics = [#tpu.dimension_semantics<parallel>], iteration_bounds = array<i64: 1>, scalar_prefetch = 0 : i64, scratch_operands = 0 : i64, tpu.core_type = #tpu.core_type<tc>, window_params = [{transform_indices = @transform_0, window_bounds = array<i64: 16, 8>}, {pipeline_mode = #tpu.pipeline_mode<synchronous>, transform_indices = @transform_1, window_bounds = array<i64: 128, 16>}, {pipeline_mode = #tpu.pipeline_mode<synchronous>, transform_indices = @transform_2, window_bounds = array<i64: 128, 1>}, {pipeline_mode = #tpu.pipeline_mode<synchronous>, transform_indices = @transform_3, window_bounds = array<i64: 128, 128>}, {pipeline_mode = #tpu.pipeline_mode<synchronous>, transform_indices = @transform_4, window_bounds = array<i64: 128, 1>}, {pipeline_mode = #tpu.pipeline_mode<synchronous>, transform_indices = @transform_5, window_bounds = array<i64: 1, 128>}, {transform_indices = @transform_6, window_bounds = array<i64: 1, 8>}]} {
    %c0 = arith.constant 0 : index
    %c0_0 = arith.constant 0 : index
    %0 = vector.load %arg2[%c0, %c0_0] : memref<128x16xbf16, #tpu.memory_space<vmem>>, vector<128x16xbf16>
    %c0_1 = arith.constant 0 : index
    %c0_2 = arith.constant 0 : index
    %1 = vector.load %arg1[%c0_1, %c0_2] : memref<16x8xbf16, #tpu.memory_space<vmem>>, vector<16x8xbf16>
    %cst = arith.constant dense<0.000000e+00> : vector<128x8xf32>
    %2 = tpu.matmul %0, %1, %cst {dimension_numbers = #tpu.dot_dimension_numbers<[1], [0], [0], [1], [0, 0, 1, 1], [], []>} : vector<128x16xbf16>, vector<16x8xbf16>, vector<128x8xf32> -> vector<128x8xf32>
    %c0_3 = arith.constant 0 : index
    %c0_4 = arith.constant 0 : index
    %3 = vector.load %arg3[%c0_3, %c0_4] : memref<128x1xf32, #tpu.memory_space<vmem>>, vector<128x1xf32>
    %4 = vector.broadcast %3 : vector<128x1xf32> to vector<128x8xf32>
    %5 = arith.addf %2, %4 : vector<128x8xf32>
    %cst_5 = arith.constant 0.000000e+00 : f32
    %6 = vector.broadcast %cst_5 : f32 to vector<128x8xf32>
    %7 = arith.maximumf %5, %6 : vector<128x8xf32>
    %c0_6 = arith.constant 0 : index
    %c0_7 = arith.constant 0 : index
    %8 = vector.load %arg4[%c0_6, %c0_7] : memref<128x128xbf16, #tpu.memory_space<vmem>>, vector<128x128xbf16>
    %9 = arith.truncf %7 : vector<128x8xf32> to vector<128x8xbf16>
    %cst_8 = arith.constant dense<0.000000e+00> : vector<128x8xf32>
    %10 = tpu.matmul %8, %9, %cst_8 {dimension_numbers = #tpu.dot_dimension_numbers<[1], [0], [0], [1], [0, 0, 1, 1], [], []>} : vector<128x128xbf16>, vector<128x8xbf16>, vector<128x8xf32> -> vector<128x8xf32>
    %c0_9 = arith.constant 0 : index
    %c0_10 = arith.constant 0 : index
    %11 = vector.load %arg5[%c0_9, %c0_10] : memref<128x1xf32, #tpu.memory_space<vmem>>, vector<128x1xf32>
    %12 = vector.broadcast %11 : vector<128x1xf32> to vector<128x8xf32>
    %13 = arith.addf %10, %12 : vector<128x8xf32>
    %cst_11 = arith.constant 0.000000e+00 : f32
    %14 = vector.broadcast %cst_11 : f32 to vector<128x8xf32>
    %15 = arith.maximumf %13, %14 : vector<128x8xf32>
    %c0_12 = arith.constant 0 : index
    %c0_13 = arith.constant 0 : index
    %16 = vector.load %arg6[%c0_12, %c0_13] : memref<1x128xbf16, #tpu.memory_space<vmem>>, vector<1x128xbf16>
    %17 = arith.truncf %15 : vector<128x8xf32> to vector<128x8xbf16>
    %cst_14 = arith.constant dense<0.000000e+00> : vector<1x8xf32>
    %18 = tpu.matmul %16, %17, %cst_14 {dimension_numbers = #tpu.dot_dimension_numbers<[1], [0], [0], [1], [0, 0, 1, 1], [], []>} : vector<1x128xbf16>, vector<128x8xbf16>, vector<1x8xf32> -> vector<1x8xf32>
    %c0_15 = arith.constant 0 : index
    %c0_16 = arith.constant 0 : index
    %19 = vector.load %arg7[%c0_15, %c0_16] : memref<1x8xf32, #tpu.memory_space<vmem>>, vector<1x8xf32>
    tpu.vector_store %arg7[%c0_15, %c0_16], %18 {strides = array<i32>} : memref<1x8xf32, #tpu.memory_space<vmem>>, vector<1x8xf32>,
    return
  }
  func.func @transform_0(%arg0: i32) -> (i32, i32) {
    %c0_i32 = arith.constant 0 : i32
    %c0_i32_0 = arith.constant 0 : i32
    return %c0_i32, %arg0 : i32, i32
  }
  func.func @transform_1(%arg0: i32) -> (i32, i32) {
    %c0_i32 = arith.constant 0 : i32
    %c0_i32_0 = arith.constant 0 : i32
    %c0_i32_1 = arith.constant 0 : i32
    return %c0_i32, %c0_i32_0 : i32, i32
  }
  func.func @transform_2(%arg0: i32) -> (i32, i32) {
    %c0_i32 = arith.constant 0 : i32
    %c0_i32_0 = arith.constant 0 : i32
    %c0_i32_1 = arith.constant 0 : i32
    return %c0_i32, %c0_i32_0 : i32, i32
  }
  func.func @transform_3(%arg0: i32) -> (i32, i32) {
    %c0_i32 = arith.constant 0 : i32
    %c0_i32_0 = arith.constant 0 : i32
    %c0_i32_1 = arith.constant 0 : i32
    return %c0_i32, %c0_i32_0 : i32, i32
  }
  func.func @transform_4(%arg0: i32) -> (i32, i32) {
    %c0_i32 = arith.constant 0 : i32
    %c0_i32_0 = arith.constant 0 : i32
    %c0_i32_1 = arith.constant 0 : i32
    return %c0_i32, %c0_i32_0 : i32, i32
  }
  func.func @transform_5(%arg0: i32) -> (i32, i32) {
    %c0_i32 = arith.constant 0 : i32
    %c0_i32_0 = arith.constant 0 : i32
    %c0_i32_1 = arith.constant 0 : i32
    return %c0_i32, %c0_i32_0 : i32, i32
  }
  func.func @transform_6(%arg0: i32) -> (i32, i32) {
    %c0_i32 = arith.constant 0 : i32
    %c0_i32_0 = arith.constant 0 : i32
    return %c0_i32, %arg0 : i32, i32
  }
}

</mosaic_0001>

<llo_original>
// kernel: tpu_custom_call.1
$region0: #{tpu_custom_call.1}
  #allocation0 [shape = 'u32[]', space=smem, size = 0x4, offset = 0x4, fixed_abs, tag = 'smem constant byte address 0x4 - core index']
  #allocation1 [shape = 'u32[72,128]{1,0:T(1,128)}', space=vmem, size = 0x9000, scoped, tag = 'internal scratch']
  %s0 = inlined_call_operand.vmem [shape: bf16[16,8], index: 0, kind: input, shape index: {}]
  %s1 = inlined_call_operand.vmem [shape: bf16[128,16], index: 1, kind: input, shape index: {}]
  %s2 = inlined_call_operand.vmem [shape: f32[128,1], index: 2, kind: input, shape index: {}]
  %s3 = inlined_call_operand.vmem [shape: bf16[128,128], index: 3, kind: input, shape index: {}]
  %s4 = inlined_call_operand.vmem [shape: f32[128,1], index: 4, kind: input, shape index: {}]
  %s5 = inlined_call_operand.vmem [shape: bf16[1,128], index: 5, kind: input, shape index: {}]
  %s6 = inlined_call_operand.hbm [shape: f32[1,8], index: 6, kind: output, shape index: {}]
  %s7 = sld [smem:[#allocation0]]
  $region34: #{tpu_custom_call.1} parent=0
    _
  %s9 = ssub.s32 1, %s7
  %s10 = scalar_select 0, %s9, %s7
  $region1: #{tpu_custom_call.1} parent=0
    #allocation2 [shape = 'u8[512]{0}', space=vmem, size = 0x400, scoped, tag = 'output window, operand 0, single buffered']
    #allocation3 [shape = 's32[1]{0}', space=sflag, size = 0x4, scoped, tag = 'scoped memory for tpu_custom_call.1']
    %11 = vsyncpa [#allocation3], 0
    // Predicated region
    $region2: #{tpu_custom_call.1} parent=1 // pred_check
      _
    $region3: #{tpu_custom_call.1} parent=1 // pred_check_branch
      %13 = sbr.rel (0) target = $region5
    $region4: #{tpu_custom_call.1} parent=1 // pred_region
      _
    $region5: #{tpu_custom_call.1} parent=1 // pred_fallthru
      _
    // Predicated region
    $region6: #{tpu_custom_call.1} parent=1 // pred_check
      _
    $region7: #{tpu_custom_call.1} parent=1 // pred_check_branch
      %15 = sbr.rel (0) target = $region9
    $region8: #{tpu_custom_call.1} parent=1 // pred_region
      _
    $region9: #{tpu_custom_call.1} parent=1 // pred_fallthru
      _
    // Predicated region
    $region10: #{tpu_custom_call.1} parent=1 // pred_check
      _
    $region11: #{tpu_custom_call.1} parent=1 // pred_check_branch
      %17 = sbr.rel (0) target = $region13
    $region12: #{tpu_custom_call.1} parent=1 // pred_region
      _
    $region13: #{tpu_custom_call.1} parent=1 // pred_fallthru
      _
    // Predicated region
    $region14: #{tpu_custom_call.1} parent=1 // pred_check
      _
    $region15: #{tpu_custom_call.1} parent=1 // pred_check_branch
      %19 = sbr.rel (0) target = $region17
    $region16: #{tpu_custom_call.1} parent=1 // pred_region
      _
    $region17: #{tpu_custom_call.1} parent=1 // pred_fallthru
      _
    // Predicated region
    $region18: #{tpu_custom_call.1} parent=1 // pred_check
      _
    $region19: #{tpu_custom_call.1} parent=1 // pred_check_branch
      %21 = sbr.rel (0) target = $region21
    $region20: #{tpu_custom_call.1} parent=1 // pred_region
      _
    $region21: #{tpu_custom_call.1} parent=1 // pred_fallthru
      _
    // Predicated region
    $region22: #{tpu_custom_call.1} parent=1 // pred_check
      _
    $region23: #{tpu_custom_call.1} parent=1 // pred_check_branch
      %23 = sbr.rel (0) target = $region25
    $region24: #{tpu_custom_call.1} parent=1 // pred_region
      _
    $region25: #{tpu_custom_call.1} parent=1 // pred_fallthru
      _
    %v25 = vld [vmem:[%s1] sm:$0xf]
    %v26 = vld [vmem:[%s1 + $0x4] sm:$0xf]
    %v27 = vld [vmem:[%s1 + $0x8] sm:$0xf]
    %v28 = vld [vmem:[%s1 + $0xc] sm:$0xf]
    %v29 = vld [vmem:[%s1 + $0x10] sm:$0xf]
    %v30 = vld [vmem:[%s1 + $0x14] sm:$0xf]
    %v31 = vld [vmem:[%s1 + $0x18] sm:$0xf]
    %v32 = vld [vmem:[%s1 + $0x1c] sm:$0xf]
    %v33 = vld [vmem:[%s1 + $0x20] sm:$0xf]
    %v34 = vld [vmem:[%s1 + $0x24] sm:$0xf]
    %v35 = vld [vmem:[%s1 + $0x28] sm:$0xf]
    %v36 = vld [vmem:[%s1 + $0x2c] sm:$0xf]
    %v37 = vld [vmem:[%s1 + $0x30] sm:$0xf]
    %v38 = vld [vmem:[%s1 + $0x34] sm:$0xf]
    %v39 = vld [vmem:[%s1 + $0x38] sm:$0xf]
    %v40 = vld [vmem:[%s1 + $0x3c] sm:$0xf]
    %v41 = vld [vmem:[%s0] sm:$0xf]
    %v42 = vld [vmem:[%s0 + $0x4] sm:$0xf]
    %v43 = vld [vmem:[%s2] sm:$0xff]
    %v44 = vld [vmem:[%s2 + $0x8] sm:$0xff]
    %v45 = vld [vmem:[%s2 + $0x10] sm:$0xff]
    %v46 = vld [vmem:[%s2 + $0x18] sm:$0xff]
    %v47 = vld [vmem:[%s2 + $0x20] sm:$0xff]
    %v48 = vld [vmem:[%s2 + $0x28] sm:$0xff]
    %v49 = vld [vmem:[%s2 + $0x30] sm:$0xff]
    %v50 = vld [vmem:[%s2 + $0x38] sm:$0xff]
    %v51 = vld [vmem:[%s2 + $0x40] sm:$0xff]
    %v52 = vld [vmem:[%s2 + $0x48] sm:$0xff]
    %v53 = vld [vmem:[%s2 + $0x50] sm:$0xff]
    %v54 = vld [vmem:[%s2 + $0x58] sm:$0xff]
    %v55 = vld [vmem:[%s2 + $0x60] sm:$0xff]
    %v56 = vld [vmem:[%s2 + $0x68] sm:$0xff]
    %v57 = vld [vmem:[%s2 + $0x70] sm:$0xff]
    %v58 = vld [vmem:[%s2 + $0x78] sm:$0xff]
    %60 = vset.pattern.permute.xlu0 0
    %61 = vperm.xlu0 %60, %v43
    %v62 = vpop.permute.xlu0 %61
    %65 = vset.pattern.permute.xlu0 0
    %66 = vperm.xlu0 %65, %v44
    %v67 = vpop.permute.xlu0 %66
    %70 = vset.pattern.permute.xlu0 0
    %71 = vperm.xlu0 %70, %v45
    %v72 = vpop.permute.xlu0 %71
    %75 = vset.pattern.permute.xlu0 0
    %76 = vperm.xlu0 %75, %v46
    %v77 = vpop.permute.xlu0 %76
    %80 = vset.pattern.permute.xlu0 0
    %81 = vperm.xlu0 %80, %v47
    %v82 = vpop.permute.xlu0 %81
    %85 = vset.pattern.permute.xlu0 0
    %86 = vperm.xlu0 %85, %v48
    %v87 = vpop.permute.xlu0 %86
    %90 = vset.pattern.permute.xlu0 0
    %91 = vperm.xlu0 %90, %v49
    %v92 = vpop.permute.xlu0 %91
    %95 = vset.pattern.permute.xlu0 0
    %96 = vperm.xlu0 %95, %v50
    %v97 = vpop.permute.xlu0 %96
    %100 = vset.pattern.permute.xlu0 0
    %101 = vperm.xlu0 %100, %v51
    %v102 = vpop.permute.xlu0 %101
    %105 = vset.pattern.permute.xlu0 0
    %106 = vperm.xlu0 %105, %v52
    %v107 = vpop.permute.xlu0 %106
    %110 = vset.pattern.permute.xlu0 0
    %111 = vperm.xlu0 %110, %v53
    %v112 = vpop.permute.xlu0 %111
    %115 = vset.pattern.permute.xlu0 0
    %116 = vperm.xlu0 %115, %v54
    %v117 = vpop.permute.xlu0 %116
    %120 = vset.pattern.permute.xlu0 0
    %121 = vperm.xlu0 %120, %v55
    %v122 = vpop.permute.xlu0 %121
    %125 = vset.pattern.permute.xlu0 0
    %126 = vperm.xlu0 %125, %v56
    %v127 = vpop.permute.xlu0 %126
    %130 = vset.pattern.permute.xlu0 0
    %131 = vperm.xlu0 %130, %v57
    %v132 = vpop.permute.xlu0 %131
    %135 = vset.pattern.permute.xlu0 0
    %136 = vperm.xlu0 %135, %v58
    %v137 = vpop.permute.xlu0 %136
    %v155 = vunpack.c.l.b16 %v25
    %v156 = vunpack.c.l.b16 %v26
    %v157 = vunpack.c.l.b16 %v27
    %v158 = vunpack.c.l.b16 %v28
    %v159 = vunpack.c.l.b16 %v29
    %v160 = vunpack.c.l.b16 %v30
    %v161 = vunpack.c.l.b16 %v31
    %v162 = vunpack.c.l.b16 %v32
    %v163 = vunpack.c.l.b16 %v33
    %v164 = vunpack.c.l.b16 %v34
    %v165 = vunpack.c.l.b16 %v35
    %v166 = vunpack.c.l.b16 %v36
    %v167 = vunpack.c.l.b16 %v37
    %v168 = vunpack.c.l.b16 %v38
    %v169 = vunpack.c.l.b16 %v39
    %v170 = vunpack.c.l.b16 %v40
    %v171 = vpack.c.b16 %v156, %v155
    %v172 = vpack.c.b16 %v158, %v157
    %v173 = vpack.c.b16 %v160, %v159
    %v174 = vpack.c.b16 %v162, %v161
    %v175 = vpack.c.b16 %v164, %v163
    %v176 = vpack.c.b16 %v166, %v165
    %v177 = vpack.c.b16 %v168, %v167
    %v178 = vpack.c.b16 %v170, %v169
    %v181 = vunpack.c.l.b16 %v41
    %v182 = vunpack.c.l.b16 %v42
    %v183 = vpack.c.b16 %v182, %v181
    %vm185 = vcmask 130048
    %v187 = vsel %vm185, %v171, 0
    %v190 = vsel %vm185, %v172, 0
    %v193 = vsel %vm185, %v173, 0
    %v196 = vsel %vm185, %v174, 0
    %v199 = vsel %vm185, %v175, 0
    %v202 = vsel %vm185, %v176, 0
    %v205 = vsel %vm185, %v177, 0
    %v208 = vsel %vm185, %v178, 0
    %210 = vmatpush.bf16.msra.mxu0 0
    %211 = vmatpush.bf16.msra.mxu0 0
    %212 = vmatpush.bf16.msra.mxu0 0
    %213 = vmatpush.bf16.msra.mxu0 0
    %214 = vmatpush.bf16.msra.mxu0 0
    %215 = vmatpush.bf16.msra.mxu0 0
    %216 = vmatpush.bf16.msra.mxu0 0
    %217 = vmatpush.bf16.msra.mxu0 %v183
    %218 = vmatmul.bf16.gmra.mxu0 %v187
    %v219 = vpop.f32.mrf.mxu0
    %v220 = vadd.f32 %v62, %v219
    %v221 = vpop.f32.mrf.mxu0
    %v222 = vadd.f32 %v67, %v221
    %223 = vmatmul.bf16.gmra.mxu0 %v190
    %v224 = vpop.f32.mrf.mxu0
    %v225 = vadd.f32 %v72, %v224
    %v226 = vpop.f32.mrf.mxu0
    %v227 = vadd.f32 %v77, %v226
    %228 = vmatmul.bf16.gmra.mxu0 %v193
    %v229 = vpop.f32.mrf.mxu0
    %v230 = vadd.f32 %v82, %v229
    %v231 = vpop.f32.mrf.mxu0
    %v232 = vadd.f32 %v87, %v231
    %233 = vmatmul.bf16.gmra.mxu0 %v196
    %v234 = vpop.f32.mrf.mxu0
    %v235 = vadd.f32 %v92, %v234
    %v236 = vpop.f32.mrf.mxu0
    %v237 = vadd.f32 %v97, %v236
    %238 = vmatmul.bf16.gmra.mxu0 %v199
    %v239 = vpop.f32.mrf.mxu0
    %v240 = vadd.f32 %v102, %v239
    %v241 = vpop.f32.mrf.mxu0
    %v242 = vadd.f32 %v107, %v241
    %243 = vmatmul.bf16.gmra.mxu0 %v202
    %v244 = vpop.f32.mrf.mxu0
    %v245 = vadd.f32 %v112, %v244
    %v246 = vpop.f32.mrf.mxu0
    %v247 = vadd.f32 %v117, %v246
    %248 = vmatmul.bf16.gmra.mxu0 %v205
    %v249 = vpop.f32.mrf.mxu0
    %v250 = vadd.f32 %v122, %v249
    %v251 = vpop.f32.mrf.mxu0
    %v252 = vadd.f32 %v127, %v251
    %253 = vmatmul.bf16.gmra.mxu0 %v208
    %v254 = vpop.f32.mrf.mxu0
    %v255 = vadd.f32 %v132, %v254
    %v256 = vpop.f32.mrf.mxu0
    %v257 = vadd.f32 %v137, %v256
    %258 = vdwg.mxu0
    %v259 = vmax.f32 %v220, 0.0
    %v260 = vmax.f32 %v222, 0.0
    %v261 = vmax.f32 %v225, 0.0
    %v262 = vmax.f32 %v227, 0.0
    %v263 = vmax.f32 %v230, 0.0
    %v264 = vmax.f32 %v232, 0.0
    %v265 = vmax.f32 %v235, 0.0
    %v266 = vmax.f32 %v237, 0.0
    %v267 = vmax.f32 %v240, 0.0
    %v268 = vmax.f32 %v242, 0.0
    %v269 = vmax.f32 %v245, 0.0
    %v270 = vmax.f32 %v247, 0.0
    %v271 = vmax.f32 %v250, 0.0
    %v272 = vmax.f32 %v252, 0.0
    %v273 = vmax.f32 %v255, 0.0
    %v274 = vmax.f32 %v257, 0.0
    %v275 = vld [vmem:[%s3] sm:$0xf]
    %v276 = vld [vmem:[%s3 + $0x4] sm:$0xf]
    %v277 = vld [vmem:[%s3 + $0x8] sm:$0xf]
    %v278 = vld [vmem:[%s3 + $0xc] sm:$0xf]
    %v279 = vld [vmem:[%s3 + $0x10] sm:$0xf]
    %v280 = vld [vmem:[%s3 + $0x14] sm:$0xf]
    %v281 = vld [vmem:[%s3 + $0x18] sm:$0xf]
    %v282 = vld [vmem:[%s3 + $0x1c] sm:$0xf]
    %v283 = vld [vmem:[%s3 + $0x20] sm:$0xf]
    %v284 = vld [vmem:[%s3 + $0x24] sm:$0xf]
    %v285 = vld [vmem:[%s3 + $0x28] sm:$0xf]
    %v286 = vld [vmem:[%s3 + $0x2c] sm:$0xf]
    %v287 = vld [vmem:[%s3 + $0x30] sm:$0xf]
    %v288 = vld [vmem:[%s3 + $0x34] sm:$0xf]
    %v289 = vld [vmem:[%s3 + $0x38] sm:$0xf]
    %v290 = vld [vmem:[%s3 + $0x3c] sm:$0xf]
    %v291 = vpack.c.bf16 %v260, %v259
    %v292 = vpack.c.bf16 %v262, %v261
    %v293 = vpack.c.bf16 %v264, %v263
    %v294 = vpack.c.bf16 %v266, %v265
    %v295 = vpack.c.bf16 %v268, %v267
    %v296 = vpack.c.bf16 %v270, %v269
    %v297 = vpack.c.bf16 %v272, %v271
    %v298 = vpack.c.bf16 %v274, %v273
    %v299 = vld [vmem:[%s4] sm:$0xff]
    %v300 = vld [vmem:[%s4 + $0x8] sm:$0xff]
    %v301 = vld [vmem:[%s4 + $0x10] sm:$0xff]
    %v302 = vld [vmem:[%s4 + $0x18] sm:$0xff]
    %v303 = vld [vmem:[%s4 + $0x20] sm:$0xff]
    %v304 = vld [vmem:[%s4 + $0x28] sm:$0xff]
    %v305 = vld [vmem:[%s4 + $0x30] sm:$0xff]
    %v306 = vld [vmem:[%s4 + $0x38] sm:$0xff]
    %v307 = vld [vmem:[%s4 + $0x40] sm:$0xff]
    %v308 = vld [vmem:[%s4 + $0x48] sm:$0xff]
    %v309 = vld [vmem:[%s4 + $0x50] sm:$0xff]
    %v310 = vld [vmem:[%s4 + $0x58] sm:$0xff]
    %v311 = vld [vmem:[%s4 + $0x60] sm:$0xff]
    %v312 = vld [vmem:[%s4 + $0x68] sm:$0xff]
    %v313 = vld [vmem:[%s4 + $0x70] sm:$0xff]
    %v314 = vld [vmem:[%s4 + $0x78] sm:$0xff]
    %316 = vset.pattern.permute.xlu0 0
    %317 = vperm.xlu0 %316, %v299
    %v318 = vpop.permute.xlu0 %317
    %321 = vset.pattern.permute.xlu0 0
    %322 = vperm.xlu0 %321, %v300
    %v323 = vpop.permute.xlu0 %322
    %326 = vset.pattern.permute.xlu0 0
    %327 = vperm.xlu0 %326, %v301
    %v328 = vpop.permute.xlu0 %327
    %331 = vset.pattern.permute.xlu0 0
    %332 = vperm.xlu0 %331, %v302
    %v333 = vpop.permute.xlu0 %332
    %336 = vset.pattern.permute.xlu0 0
    %337 = vperm.xlu0 %336, %v303
    %v338 = vpop.permute.xlu0 %337
    %341 = vset.pattern.permute.xlu0 0
    %342 = vperm.xlu0 %341, %v304
    %v343 = vpop.permute.xlu0 %342
    %346 = vset.pattern.permute.xlu0 0
    %347 = vperm.xlu0 %346, %v305
    %v348 = vpop.permute.xlu0 %347
    %351 = vset.pattern.permute.xlu0 0
    %352 = vperm.xlu0 %351, %v306
    %v353 = vpop.permute.xlu0 %352
    %356 = vset.pattern.permute.xlu0 0
    %357 = vperm.xlu0 %356, %v307
    %v358 = vpop.permute.xlu0 %357
    %361 = vset.pattern.permute.xlu0 0
    %362 = vperm.xlu0 %361, %v308
    %v363 = vpop.permute.xlu0 %362
    %366 = vset.pattern.permute.xlu0 0
    %367 = vperm.xlu0 %366, %v309
    %v368 = vpop.permute.xlu0 %367
    %371 = vset.pattern.permute.xlu0 0
    %372 = vperm.xlu0 %371, %v310
    %v373 = vpop.permute.xlu0 %372
    %376 = vset.pattern.permute.xlu0 0
    %377 = vperm.xlu0 %376, %v311
    %v378 = vpop.permute.xlu0 %377
    %381 = vset.pattern.permute.xlu0 0
    %382 = vperm.xlu0 %381, %v312
    %v383 = vpop.permute.xlu0 %382
    %386 = vset.pattern.permute.xlu0 0
    %387 = vperm.xlu0 %386, %v313
    %v388 = vpop.permute.xlu0 %387
    %391 = vset.pattern.permute.xlu0 0
    %392 = vperm.xlu0 %391, %v314
    %v393 = vpop.permute.xlu0 %392
    %v411 = vunpack.c.l.b16 %v275
    %v412 = vunpack.c.l.b16 %v276
    %v413 = vunpack.c.l.b16 %v277
    %v414 = vunpack.c.l.b16 %v278
    %v415 = vunpack.c.l.b16 %v279
    %v416 = vunpack.c.l.b16 %v280
    %v417 = vunpack.c.l.b16 %v281
    %v418 = vunpack.c.l.b16 %v282
    %v419 = vunpack.c.l.b16 %v283
    %v420 = vunpack.c.l.b16 %v284
    %v421 = vunpack.c.l.b16 %v285
    %v422 = vunpack.c.l.b16 %v286
    %v423 = vunpack.c.l.b16 %v287
    %v424 = vunpack.c.l.b16 %v288
    %v425 = vunpack.c.l.b16 %v289
    %v426 = vunpack.c.l.b16 %v290
    %v427 = vpack.c.b16 %v412, %v411
    %v428 = vpack.c.b16 %v414, %v413
    %v429 = vpack.c.b16 %v416, %v415
    %v430 = vpack.c.b16 %v418, %v417
    %v431 = vpack.c.b16 %v420, %v419
    %v432 = vpack.c.b16 %v422, %v421
    %v433 = vpack.c.b16 %v424, %v423
    %v434 = vpack.c.b16 %v426, %v425
    %443 = vmatpush.bf16.msra.mxu0 %v298
    %444 = vmatpush.bf16.msra.mxu0 %v297
    %445 = vmatpush.bf16.msra.mxu0 %v296
    %446 = vmatpush.bf16.msra.mxu0 %v295
    %447 = vmatpush.bf16.msra.mxu0 %v294
    %448 = vmatpush.bf16.msra.mxu0 %v293
    %449 = vmatpush.bf16.msra.mxu0 %v292
    %450 = vmatpush.bf16.msra.mxu0 %v291
    %451 = vmatmul.bf16.gmra.mxu0 %v427
    %v452 = vpop.f32.mrf.mxu0
    %v453 = vadd.f32 %v318, %v452
    %v454 = vpop.f32.mrf.mxu0
    %v455 = vadd.f32 %v323, %v454
    %456 = vmatmul.bf16.gmra.mxu0 %v428
    %v457 = vpop.f32.mrf.mxu0
    %v458 = vadd.f32 %v328, %v457
    %v459 = vpop.f32.mrf.mxu0
    %v460 = vadd.f32 %v333, %v459
    %461 = vmatmul.bf16.gmra.mxu0 %v429
    %v462 = vpop.f32.mrf.mxu0
    %v463 = vadd.f32 %v338, %v462
    %v464 = vpop.f32.mrf.mxu0
    %v465 = vadd.f32 %v343, %v464
    %466 = vmatmul.bf16.gmra.mxu0 %v430
    %v467 = vpop.f32.mrf.mxu0
    %v468 = vadd.f32 %v348, %v467
    %v469 = vpop.f32.mrf.mxu0
    %v470 = vadd.f32 %v353, %v469
    %471 = vmatmul.bf16.gmra.mxu0 %v431
    %v472 = vpop.f32.mrf.mxu0
    %v473 = vadd.f32 %v358, %v472
    %v474 = vpop.f32.mrf.mxu0
    %v475 = vadd.f32 %v363, %v474
    %476 = vmatmul.bf16.gmra.mxu0 %v432
    %v477 = vpop.f32.mrf.mxu0
    %v478 = vadd.f32 %v368, %v477
    %v479 = vpop.f32.mrf.mxu0
    %v480 = vadd.f32 %v373, %v479
    %481 = vmatmul.bf16.gmra.mxu0 %v433
    %v482 = vpop.f32.mrf.mxu0
    %v483 = vadd.f32 %v378, %v482
    %v484 = vpop.f32.mrf.mxu0
    %v485 = vadd.f32 %v383, %v484
    %486 = vmatmul.bf16.gmra.mxu0 %v434
    %v487 = vpop.f32.mrf.mxu0
    %v488 = vadd.f32 %v388, %v487
    %v489 = vpop.f32.mrf.mxu0
    %v490 = vadd.f32 %v393, %v489
    %491 = vdwg.mxu0
    %v492 = vmax.f32 %v453, 0.0
    %v493 = vmax.f32 %v455, 0.0
    %v494 = vmax.f32 %v458, 0.0
    %v495 = vmax.f32 %v460, 0.0
    %v496 = vmax.f32 %v463, 0.0
    %v497 = vmax.f32 %v465, 0.0
    %v498 = vmax.f32 %v468, 0.0
    %v499 = vmax.f32 %v470, 0.0
    %v500 = vmax.f32 %v473, 0.0
    %v501 = vmax.f32 %v475, 0.0
    %v502 = vmax.f32 %v478, 0.0
    %v503 = vmax.f32 %v480, 0.0
    %v504 = vmax.f32 %v483, 0.0
    %v505 = vmax.f32 %v485, 0.0
    %v506 = vmax.f32 %v488, 0.0
    %v507 = vmax.f32 %v490, 0.0
    %v508 = vld [vmem:[%s5] sm:$0x1]
    %v509 = vpack.c.bf16 %v493, %v492
    %v510 = vpack.c.bf16 %v495, %v494
    %v511 = vpack.c.bf16 %v497, %v496
    %v512 = vpack.c.bf16 %v499, %v498
    %v513 = vpack.c.bf16 %v501, %v500
    %v514 = vpack.c.bf16 %v503, %v502
    %v515 = vpack.c.bf16 %v505, %v504
    %v516 = vpack.c.bf16 %v507, %v506
    %517 = vmatpush.bf16.msra.mxu0 %v516
    %518 = vmatpush.bf16.msra.mxu0 %v515
    %519 = vmatpush.bf16.msra.mxu0 %v514
    %520 = vmatpush.bf16.msra.mxu0 %v513
    %521 = vmatpush.bf16.msra.mxu0 %v512
    %522 = vmatpush.bf16.msra.mxu0 %v511
    %523 = vmatpush.bf16.msra.mxu0 %v510
    %524 = vmatpush.bf16.msra.mxu0 %v509
    %525 = vmatmul.bf16.gmra.mxu0 %v508
    %v526 = vpop.f32.mrf.mxu0
    %v527 = vadd.f32 0.0, %v526
    %v528 = vpop.f32.mrf.mxu0
    %529 = vdwg.mxu0
    %vm530 = vcmask 57344
    %531 = vst.msk [vmem:[#allocation2] sm:$0x1] %vm530, %v527
    // Predicated region
    $region26: #{tpu_custom_call.1} parent=1 // pred_check
      _
    $region27: #{tpu_custom_call.1} parent=1 // pred_check_branch
      %533 = sbr.rel (0) target = $region29
    $region28: #{tpu_custom_call.1} parent=1 // pred_region
      %535 = vsyncadd [#allocation3], 0
      %s537 = sshll.u32 [#allocation2], 4
      %s538 = int_to_ptr.vmem [resolvable:$true] %s537
      %s539 = sshll.u32 %s6, 4
      %s540 = int_to_ptr.hbm [resolvable:$true] %s539
      %542 = dma.vmem_to_hbm [thread:$0]  %s538, 16, %s540, [#allocation3]
    $region29: #{tpu_custom_call.1} parent=1 // pred_fallthru
      _
    // Predicated region
    $region30: #{tpu_custom_call.1} parent=1 // pred_check
      _
    $region31: #{tpu_custom_call.1} parent=1 // pred_check_branch
      %544 = sbr.rel (0) target = $region33
    $region32: #{tpu_custom_call.1} parent=1 // pred_region
      %546 = dma.done [#allocation3], 16
    $region33: #{tpu_custom_call.1} parent=1 // pred_fallthru
      _
    %547 = vsyncpa [#allocation3], 1

</llo_original>
